<compile_context>
chip_gen: v7x
topology: tpu7x:2x2x1
jax: 0.10.0
libtpu: 0.0.40
codegen_flags: <defaults>
</compile_context>

<pallas_src>
import functools

import jax
import jax.numpy as jnp
from jax.experimental import pallas as pl
from jax.experimental.pallas import tpu as pltpu

EPS = 1e-5


def _tap_masks(H, W, d):
    """(9, H*W) per-tap validity masks: 1.0 where the dilated 3x3 tap lands
    inside the image, 0.0 where it falls into 'same' zero padding (these are
    exactly the positions where a flat lane-roll would wrap rows / the image)."""
    hh = jnp.arange(H).reshape(H, 1)
    ww = jnp.arange(W).reshape(1, W)
    ms = []
    for kh in range(3):
        for kw in range(3):
            oh, ow = (kh - 1) * d, (kw - 1) * d
            m = ((hh + oh >= 0) & (hh + oh < H) &
                 (ww + ow >= 0) & (ww + ow < W))
            ms.append(m.astype(jnp.float32).reshape(H * W))
    return jnp.stack(ms)                                        # (9, H*W)


def _make_kernel(N, Cin, Cout, H, W, d):
    HW = H * W
    NCin = N * Cin        # batch-merged input rows
    NC = N * Cout         # batch-merged output rows (per branch)
    R = 2 * NC            # stage-1 rows: [branch-1 ; branch-2a]

    def kernel(x_ref, mask_ref, w12_ref, w2b_ref, cols_ref, o_ref):
        # x_ref   : (N*Cin, HW)         lane-dense flattened NCHW input
        # mask_ref: (9, HW)             per-tap boundary masks
        # w12_ref : (2*N*Cout, N*Cin)   [W1 ; BN-folded W2a], block-diag over images
        # w2b_ref : (N*Cout, 9*N*Cout)  BN-folded 3x3 weights, tap-major, block-diag
        # cols_ref: (2*N*Cout, 4)       packed per-row bias / BN-shift / BN-scale
        # o_ref   : (N*Cout, HW)        lane-dense output (single dense store)
        x2 = x_ref[...]                 # (NCin, HW)
        w12 = w12_ref[...]              # (R, NCin)
        w2b = w2b_ref[...]              # (NC, 9*NC)
        cols = cols_ref[...]            # (R, 4)

        # ---- Stage 1: both 1x1 convs (branch 1 and branch 2a), both images,
        #      as NCin rank-1 column FMAs on the full (R, HW) block (VPU). ----
        s = jnp.zeros((R, HW), jnp.float32)
        for c in range(NCin):
            s = s + w12[:, c:c + 1] * x2[c:c + 1, :]
        s = jnp.maximum(s + cols[:, 0:1], 0.0)   # conv bias / folded BN shift + ReLU
        x1 = s[:NC]                               # branch-1 activations   (NC, HW)
        t = s[NC:]                                # stage-2a activations   (NC, HW)

        # ---- Stage 2: 3x3 dilated conv.  Each tap is a lane-roll of t (no halo
        #      scratch, no store->load round trip), zeroed at image borders by
        #      the mask; channel mixing again via rank-1 column FMAs. ----
        y = jnp.zeros((NC, HW), jnp.float32)
        for kh in range(3):
            for kw in range(3):
                k = kh * 3 + kw
                off = (kh - 1) * d * W + (kw - 1) * d          # flat tap offset
                if off == 0:
                    tap = t                                     # center tap: mask all-ones
                else:
                    tap = (pltpu.roll(t, shift=(-off) % HW, axis=1)
                           * mask_ref[k:k + 1, :])
                for c in range(NC):
                    col = k * NC + c
                    y = y + w2b[:, col:col + 1] * tap[c:c + 1, :]
        y = jnp.maximum(y + cols[:NC, 1:2], 0.0)  # conv bias + folded BN shift + ReLU

        # ---- Residual add + final (eval-mode) BN; one dense (NC, HW) store. ----
        o_ref[...] = cols[:NC, 2:3] * (y + x1) + cols[:NC, 3:4]

    return kernel


@functools.partial(jax.jit, static_argnames=("dilation",))
def resnet_conv2d_block(x_nchw, packed, dilation):
    N, Cin, H, W = x_nchw.shape
    HW = H * W
    NC = packed["w2b"].shape[0]          # N * Cout (static under jit)
    Cout = NC // N

    x2 = x_nchw.reshape(N * Cin, HW)     # free reshape: contiguous NCHW -> rows

    out = pl.pallas_call(
        _make_kernel(N, Cin, Cout, H, W, dilation),
        out_shape=jax.ShapeDtypeStruct((NC, HW), jnp.float32),
        in_specs=[pl.BlockSpec(memory_space=pltpu.MemorySpace.VMEM)] * 5,
        out_specs=pl.BlockSpec(memory_space=pltpu.MemorySpace.VMEM),
    )(x2, packed["masks"], packed["w12"], packed["w2b"], packed["cols"])

    return out.reshape(N, Cout, H, W)    # free reshape back to NCHW


def init_params(key, filters, half_channel):
    """Deterministic synthetic parameters matching the PyTorch module shapes."""
    cout = filters // 2 if half_channel else filters
    cin = filters
    ks = jax.random.split(key, 12)

    def conv_init(kw, kb, shape):
        fan_in = shape[1] * shape[2] * shape[3]
        bound = 1.0 / jnp.sqrt(float(fan_in))
        w = jax.random.uniform(kw, shape, jnp.float32, -bound, bound)
        b = jax.random.uniform(kb, (shape[0],), jnp.float32, -bound, bound)
        return w, b

    W1_4d, b1 = conv_init(ks[0], ks[1], (cout, cin, 1, 1))      # conv_block1 1x1
    W2a_4d, b2a = conv_init(ks[2], ks[3], (cout, cin, 1, 1))    # conv_block2 1x1
    W2b, b2b = conv_init(ks[4], ks[5], (cout, cout, 3, 3))      # conv_block2 3x3

    g2a = jax.random.uniform(ks[6], (cout,), jnp.float32, 0.5, 1.5)
    be2a = jax.random.uniform(ks[7], (cout,), jnp.float32, -0.5, 0.5)
    g2b = jax.random.uniform(ks[8], (cout,), jnp.float32, 0.5, 1.5)
    be2b = jax.random.uniform(ks[9], (cout,), jnp.float32, -0.5, 0.5)
    gf = jax.random.uniform(ks[10], (cout,), jnp.float32, 0.5, 1.5)
    bef = jax.random.uniform(ks[11], (cout,), jnp.float32, -0.5, 0.5)

    return {
        "W1": W1_4d.reshape(cout, cin), "b1": b1,
        "W2a": W2a_4d.reshape(cout, cin), "b2a": b2a,
        "W2b": W2b, "b2b": b2b,
        "g2a": g2a, "be2a": be2a, "g2b": g2b, "be2b": be2b,
        "gf": gf, "bef": bef,
    }


def pack_params(p, N, H, W, dilation):
    """Fold eval-mode BN into the convs and pack everything the kernel needs
    into 3 small weight arrays (one HBM->VMEM DMA each) + the tap masks."""
    Cout = p["b1"].shape[0]
    eye_n = jnp.eye(N, dtype=jnp.float32)

    # Eval-mode BN (running_mean=0, running_var=1): BN(z) = g/sqrt(1+eps)*z + b.
    s2a = p["g2a"] / jnp.sqrt(1.0 + EPS)
    s2b = p["g2b"] / jnp.sqrt(1.0 + EPS)
    w2a_f = s2a[:, None] * p["W2a"]                             # fold BN scale
    t2a = s2a * p["b2a"] + p["be2a"]                            # bias + BN shift
    w2b_f = s2b[:, None, None] * p["W2b"].reshape(Cout, Cout, 9)
    t2b = s2b * p["b2b"] + p["be2b"]
    sf = p["gf"] / jnp.sqrt(1.0 + EPS)
    tf = p["bef"]

    # Stacked 1x1 weights [branch1 ; branch2a], block-diagonal over the batch.
    w12 = jnp.concatenate([jnp.kron(eye_n, p["W1"]),
                           jnp.kron(eye_n, w2a_f)], axis=0)     # (2*N*Cout, N*Cin)
    # 3x3 weights, tap-major columns (k = kh*3 + kw), block-diag over the batch.
    w2b = jnp.concatenate([jnp.kron(eye_n, w2b_f[:, :, k]) for k in range(9)],
                          axis=1)                               # (N*Cout, 9*N*Cout)

    NC = N * Cout
    zeros = jnp.zeros((NC,), jnp.float32)
    cols = jnp.stack([
        jnp.concatenate([jnp.tile(p["b1"], N), jnp.tile(t2a, N)]),  # stage-1 bias/shift
        jnp.concatenate([jnp.tile(t2b, N), zeros]),                 # stage-2b bias/shift
        jnp.concatenate([jnp.tile(sf, N), zeros]),                  # final BN scale
        jnp.concatenate([jnp.tile(tf, N), zeros]),                  # final BN shift
    ], axis=1)                                                      # (2*N*Cout, 4)

    return {"w12": w12, "w2b": w2b, "cols": cols,
            "masks": _tap_masks(H, W, dilation)}


def reference(x, p, dilation):
    """Pure-JAX reference of the PyTorch forward (eval-mode BN)."""
    def bn(z, g, b):
        return ((g / jnp.sqrt(1.0 + EPS))[None, :, None, None] * z
                + b[None, :, None, None])

    x1 = jnp.einsum('oi,nihw->nohw', p["W1"], x) + p["b1"][None, :, None, None]
    x1 = jnp.maximum(x1, 0.0)

    t = jnp.einsum('oi,nihw->nohw', p["W2a"], x) + p["b2a"][None, :, None, None]
    t = jnp.maximum(bn(t, p["g2a"], p["be2a"]), 0.0)

    y = jax.lax.conv_general_dilated(
        t, p["W2b"], window_strides=(1, 1),
        padding=[(dilation, dilation), (dilation, dilation)],
        rhs_dilation=(dilation, dilation),
        dimension_numbers=("NCHW", "OIHW", "NCHW"))
    y = y + p["b2b"][None, :, None, None]
    y = jnp.maximum(bn(y, p["g2b"], p["be2b"]), 0.0)

    return bn(y + x1, p["gf"], p["bef"])


if __name__ == "__main__":
    key = jax.random.PRNGKey(0)
    k_x, k_p = jax.random.split(key)

    filters, half_channel, dilation_rate = 4, True, 2
    N, H, W = 2, 16, 16
    x = jax.random.normal(k_x, (N, filters, H, W), jnp.float32)   # NCHW input

    params = init_params(k_p, filters, half_channel)
    packed = pack_params(params, N, H, W, dilation_rate)

    out = resnet_conv2d_block(x, packed, dilation=dilation_rate)
    out = jax.block_until_ready(out)

    ref = jax.block_until_ready(reference(x, params, dilation_rate))
    assert out.shape == (N, filters // 2, H, W)
    assert jnp.allclose(out, ref, atol=1e-4, rtol=1e-4), "mismatch vs reference"

    print("KERNEL_OK")
</pallas_src>

<mosaic_0001>
module attributes {stable_mosaic.version = 11 : i64} {
  func.func @kernel(%arg0: memref<8x256xf32, #tpu.memory_space<vmem>>, %arg1: memref<9x256xf32, #tpu.memory_space<vmem>>, %arg2: memref<8x8xf32, #tpu.memory_space<vmem>>, %arg3: memref<4x36xf32, #tpu.memory_space<vmem>>, %arg4: memref<8x4xf32, #tpu.memory_space<vmem>>, %arg5: memref<4x256xf32, #tpu.memory_space<vmem>>) attributes {dimension_semantics = [], scalar_prefetch = 0 : i64, scratch_operands = 0 : i64, tpu.core_type = #tpu.core_type<tc>} {
    %c0 = arith.constant 0 : index
    %c0_0 = arith.constant 0 : index
    %0 = vector.load %arg0[%c0, %c0_0] : memref<8x256xf32, #tpu.memory_space<vmem>>, vector<8x256xf32>
    %c0_1 = arith.constant 0 : index
    %c0_2 = arith.constant 0 : index
    %1 = vector.load %arg2[%c0_1, %c0_2] : memref<8x8xf32, #tpu.memory_space<vmem>>, vector<8x8xf32>
    %c0_3 = arith.constant 0 : index
    %c0_4 = arith.constant 0 : index
    %2 = vector.load %arg3[%c0_3, %c0_4] : memref<4x36xf32, #tpu.memory_space<vmem>>, vector<4x36xf32>
    %c0_5 = arith.constant 0 : index
    %c0_6 = arith.constant 0 : index
    %3 = vector.load %arg4[%c0_5, %c0_6] : memref<8x4xf32, #tpu.memory_space<vmem>>, vector<8x4xf32>
    %cst = arith.constant 0.000000e+00 : f32
    %4 = vector.broadcast %cst : f32 to vector<8x256xf32>
    %5 = vector.extract_strided_slice %1 {offsets = [0, 0], sizes = [8, 1], strides = [1, 1]} : vector<8x8xf32> to vector<8x1xf32>
    %6 = vector.extract_strided_slice %0 {offsets = [0, 0], sizes = [1, 256], strides = [1, 1]} : vector<8x256xf32> to vector<1x256xf32>
    %7 = vector.broadcast %5 : vector<8x1xf32> to vector<8x256xf32>
    %8 = vector.broadcast %6 : vector<1x256xf32> to vector<8x256xf32>
    %9 = arith.mulf %7, %8 : vector<8x256xf32>
    %10 = arith.addf %4, %9 : vector<8x256xf32>
    %11 = vector.extract_strided_slice %1 {offsets = [0, 1], sizes = [8, 1], strides = [1, 1]} : vector<8x8xf32> to vector<8x1xf32>
    %12 = vector.extract_strided_slice %0 {offsets = [1, 0], sizes = [1, 256], strides = [1, 1]} : vector<8x256xf32> to vector<1x256xf32>
    %13 = vector.broadcast %11 : vector<8x1xf32> to vector<8x256xf32>
    %14 = vector.broadcast %12 : vector<1x256xf32> to vector<8x256xf32>
    %15 = arith.mulf %13, %14 : vector<8x256xf32>
    %16 = arith.addf %10, %15 : vector<8x256xf32>
    %17 = vector.extract_strided_slice %1 {offsets = [0, 2], sizes = [8, 1], strides = [1, 1]} : vector<8x8xf32> to vector<8x1xf32>
    %18 = vector.extract_strided_slice %0 {offsets = [2, 0], sizes = [1, 256], strides = [1, 1]} : vector<8x256xf32> to vector<1x256xf32>
    %19 = vector.broadcast %17 : vector<8x1xf32> to vector<8x256xf32>
    %20 = vector.broadcast %18 : vector<1x256xf32> to vector<8x256xf32>
    %21 = arith.mulf %19, %20 : vector<8x256xf32>
    %22 = arith.addf %16, %21 : vector<8x256xf32>
    %23 = vector.extract_strided_slice %1 {offsets = [0, 3], sizes = [8, 1], strides = [1, 1]} : vector<8x8xf32> to vector<8x1xf32>
    %24 = vector.extract_strided_slice %0 {offsets = [3, 0], sizes = [1, 256], strides = [1, 1]} : vector<8x256xf32> to vector<1x256xf32>
    %25 = vector.broadcast %23 : vector<8x1xf32> to vector<8x256xf32>
    %26 = vector.broadcast %24 : vector<1x256xf32> to vector<8x256xf32>
    %27 = arith.mulf %25, %26 : vector<8x256xf32>
    %28 = arith.addf %22, %27 : vector<8x256xf32>
    %29 = vector.extract_strided_slice %1 {offsets = [0, 4], sizes = [8, 1], strides = [1, 1]} : vector<8x8xf32> to vector<8x1xf32>
    %30 = vector.extract_strided_slice %0 {offsets = [4, 0], sizes = [1, 256], strides = [1, 1]} : vector<8x256xf32> to vector<1x256xf32>
    %31 = vector.broadcast %29 : vector<8x1xf32> to vector<8x256xf32>
    %32 = vector.broadcast %30 : vector<1x256xf32> to vector<8x256xf32>
    %33 = arith.mulf %31, %32 : vector<8x256xf32>
    %34 = arith.addf %28, %33 : vector<8x256xf32>
    %35 = vector.extract_strided_slice %1 {offsets = [0, 5], sizes = [8, 1], strides = [1, 1]} : vector<8x8xf32> to vector<8x1xf32>
    %36 = vector.extract_strided_slice %0 {offsets = [5, 0], sizes = [1, 256], strides = [1, 1]} : vector<8x256xf32> to vector<1x256xf32>
    %37 = vector.broadcast %35 : vector<8x1xf32> to vector<8x256xf32>
    %38 = vector.broadcast %36 : vector<1x256xf32> to vector<8x256xf32>
    %39 = arith.mulf %37, %38 : vector<8x256xf32>
    %40 = arith.addf %34, %39 : vector<8x256xf32>
    %41 = vector.extract_strided_slice %1 {offsets = [0, 6], sizes = [8, 1], strides = [1, 1]} : vector<8x8xf32> to vector<8x1xf32>
    %42 = vector.extract_strided_slice %0 {offsets = [6, 0], sizes = [1, 256], strides = [1, 1]} : vector<8x256xf32> to vector<1x256xf32>
    %43 = vector.broadcast %41 : vector<8x1xf32> to vector<8x256xf32>
    %44 = vector.broadcast %42 : vector<1x256xf32> to vector<8x256xf32>
    %45 = arith.mulf %43, %44 : vector<8x256xf32>
    %46 = arith.addf %40, %45 : vector<8x256xf32>
    %47 = vector.extract_strided_slice %1 {offsets = [0, 7], sizes = [8, 1], strides = [1, 1]} : vector<8x8xf32> to vector<8x1xf32>
    %48 = vector.extract_strided_slice %0 {offsets = [7, 0], sizes = [1, 256], strides = [1, 1]} : vector<8x256xf32> to vector<1x256xf32>
    %49 = vector.broadcast %47 : vector<8x1xf32> to vector<8x256xf32>
    %50 = vector.broadcast %48 : vector<1x256xf32> to vector<8x256xf32>
    %51 = arith.mulf %49, %50 : vector<8x256xf32>
    %52 = arith.addf %46, %51 : vector<8x256xf32>
    %53 = vector.extract_strided_slice %3 {offsets = [0, 0], sizes = [8, 1], strides = [1, 1]} : vector<8x4xf32> to vector<8x1xf32>
    %54 = vector.broadcast %53 : vector<8x1xf32> to vector<8x256xf32>
    %55 = arith.addf %52, %54 : vector<8x256xf32>
    %cst_7 = arith.constant 0.000000e+00 : f32
    %56 = vector.broadcast %cst_7 : f32 to vector<8x256xf32>
    %57 = arith.maximumf %55, %56 : vector<8x256xf32>
    %58 = vector.extract_strided_slice %57 {offsets = [0, 0], sizes = [4, 256], strides = [1, 1]} : vector<8x256xf32> to vector<4x256xf32>
    %59 = vector.extract_strided_slice %57 {offsets = [4, 0], sizes = [4, 256], strides = [1, 1]} : vector<8x256xf32> to vector<4x256xf32>
    %cst_8 = arith.constant 0.000000e+00 : f32
    %60 = vector.broadcast %cst_8 : f32 to vector<4x256xf32>
    %c34_i32 = arith.constant 34 : i32
    %61 = tpu.dynamic_rotate %59 by %c34_i32 dim 1 : vector<4x256xf32>, i32 -> vector<4x256xf32>
    %c0_9 = arith.constant 0 : index
    %c0_10 = arith.constant 0 : index
    %62 = vector.load %arg1[%c0_9, %c0_10] : memref<9x256xf32, #tpu.memory_space<vmem>>, vector<1x256xf32>
    %63 = vector.broadcast %62 : vector<1x256xf32> to vector<4x256xf32>
    %64 = arith.mulf %61, %63 : vector<4x256xf32>
    %65 = vector.extract_strided_slice %2 {offsets = [0, 0], sizes = [4, 1], strides = [1, 1]} : vector<4x36xf32> to vector<4x1xf32>
    %66 = vector.extract_strided_slice %64 {offsets = [0, 0], sizes = [1, 256], strides = [1, 1]} : vector<4x256xf32> to vector<1x256xf32>
    %67 = vector.broadcast %65 : vector<4x1xf32> to vector<4x256xf32>
    %68 = vector.broadcast %66 : vector<1x256xf32> to vector<4x256xf32>
    %69 = arith.mulf %67, %68 : vector<4x256xf32>
    %70 = arith.addf %60, %69 : vector<4x256xf32>
    %71 = vector.extract_strided_slice %2 {offsets = [0, 1], sizes = [4, 1], strides = [1, 1]} : vector<4x36xf32> to vector<4x1xf32>
    %72 = vector.extract_strided_slice %64 {offsets = [1, 0], sizes = [1, 256], strides = [1, 1]} : vector<4x256xf32> to vector<1x256xf32>
    %73 = vector.broadcast %71 : vector<4x1xf32> to vector<4x256xf32>
    %74 = vector.broadcast %72 : vector<1x256xf32> to vector<4x256xf32>
    %75 = arith.mulf %73, %74 : vector<4x256xf32>
    %76 = arith.addf %70, %75 : vector<4x256xf32>
    %77 = vector.extract_strided_slice %2 {offsets = [0, 2], sizes = [4, 1], strides = [1, 1]} : vector<4x36xf32> to vector<4x1xf32>
    %78 = vector.extract_strided_slice %64 {offsets = [2, 0], sizes = [1, 256], strides = [1, 1]} : vector<4x256xf32> to vector<1x256xf32>
    %79 = vector.broadcast %77 : vector<4x1xf32> to vector<4x256xf32>
    %80 = vector.broadcast %78 : vector<1x256xf32> to vector<4x256xf32>
    %81 = arith.mulf %79, %80 : vector<4x256xf32>
    %82 = arith.addf %76, %81 : vector<4x256xf32>
    %83 = vector.extract_strided_slice %2 {offsets = [0, 3], sizes = [4, 1], strides = [1, 1]} : vector<4x36xf32> to vector<4x1xf32>
    %84 = vector.extract_strided_slice %64 {offsets = [3, 0], sizes = [1, 256], strides = [1, 1]} : vector<4x256xf32> to vector<1x256xf32>
    %85 = vector.broadcast %83 : vector<4x1xf32> to vector<4x256xf32>
    %86 = vector.broadcast %84 : vector<1x256xf32> to vector<4x256xf32>
    %87 = arith.mulf %85, %86 : vector<4x256xf32>
    %88 = arith.addf %82, %87 : vector<4x256xf32>
    %c32_i32 = arith.constant 32 : i32
    %89 = tpu.dynamic_rotate %59 by %c32_i32 dim 1 : vector<4x256xf32>, i32 -> vector<4x256xf32>
    %c1 = arith.constant 1 : index
    %c0_11 = arith.constant 0 : index
    %90 = vector.load %arg1[%c1, %c0_11] : memref<9x256xf32, #tpu.memory_space<vmem>>, vector<1x256xf32>
    %91 = vector.broadcast %90 : vector<1x256xf32> to vector<4x256xf32>
    %92 = arith.mulf %89, %91 : vector<4x256xf32>
    %93 = vector.extract_strided_slice %2 {offsets = [0, 4], sizes = [4, 1], strides = [1, 1]} : vector<4x36xf32> to vector<4x1xf32>
    %94 = vector.extract_strided_slice %92 {offsets = [0, 0], sizes = [1, 256], strides = [1, 1]} : vector<4x256xf32> to vector<1x256xf32>
    %95 = vector.broadcast %93 : vector<4x1xf32> to vector<4x256xf32>
    %96 = vector.broadcast %94 : vector<1x256xf32> to vector<4x256xf32>
    %97 = arith.mulf %95, %96 : vector<4x256xf32>
    %98 = arith.addf %88, %97 : vector<4x256xf32>
    %99 = vector.extract_strided_slice %2 {offsets = [0, 5], sizes = [4, 1], strides = [1, 1]} : vector<4x36xf32> to vector<4x1xf32>
    %100 = vector.extract_strided_slice %92 {offsets = [1, 0], sizes = [1, 256], strides = [1, 1]} : vector<4x256xf32> to vector<1x256xf32>
    %101 = vector.broadcast %99 : vector<4x1xf32> to vector<4x256xf32>
    %102 = vector.broadcast %100 : vector<1x256xf32> to vector<4x256xf32>
    %103 = arith.mulf %101, %102 : vector<4x256xf32>
    %104 = arith.addf %98, %103 : vector<4x256xf32>
    %105 = vector.extract_strided_slice %2 {offsets = [0, 6], sizes = [4, 1], strides = [1, 1]} : vector<4x36xf32> to vector<4x1xf32>
    %106 = vector.extract_strided_slice %92 {offsets = [2, 0], sizes = [1, 256], strides = [1, 1]} : vector<4x256xf32> to vector<1x256xf32>
    %107 = vector.broadcast %105 : vector<4x1xf32> to vector<4x256xf32>
    %108 = vector.broadcast %106 : vector<1x256xf32> to vector<4x256xf32>
    %109 = arith.mulf %107, %108 : vector<4x256xf32>
    %110 = arith.addf %104, %109 : vector<4x256xf32>
    %111 = vector.extract_strided_slice %2 {offsets = [0, 7], sizes = [4, 1], strides = [1, 1]} : vector<4x36xf32> to vector<4x1xf32>
    %112 = vector.extract_strided_slice %92 {offsets = [3, 0], sizes = [1, 256], strides = [1, 1]} : vector<4x256xf32> to vector<1x256xf32>
    %113 = vector.broadcast %111 : vector<4x1xf32> to vector<4x256xf32>
    %114 = vector.broadcast %112 : vector<1x256xf32> to vector<4x256xf32>
    %115 = arith.mulf %113, %114 : vector<4x256xf32>
    %116 = arith.addf %110, %115 : vector<4x256xf32>
    %c30_i32 = arith.constant 30 : i32
    %117 = tpu.dynamic_rotate %59 by %c30_i32 dim 1 : vector<4x256xf32>, i32 -> vector<4x256xf32>
    %c2 = arith.constant 2 : index
    %c0_12 = arith.constant 0 : index
    %118 = vector.load %arg1[%c2, %c0_12] : memref<9x256xf32, #tpu.memory_space<vmem>>, vector<1x256xf32>
    %119 = vector.broadcast %118 : vector<1x256xf32> to vector<4x256xf32>
    %120 = arith.mulf %117, %119 : vector<4x256xf32>
    %121 = vector.extract_strided_slice %2 {offsets = [0, 8], sizes = [4, 1], strides = [1, 1]} : vector<4x36xf32> to vector<4x1xf32>
    %122 = vector.extract_strided_slice %120 {offsets = [0, 0], sizes = [1, 256], strides = [1, 1]} : vector<4x256xf32> to vector<1x256xf32>
    %123 = vector.broadcast %121 : vector<4x1xf32> to vector<4x256xf32>
    %124 = vector.broadcast %122 : vector<1x256xf32> to vector<4x256xf32>
    %125 = arith.mulf %123, %124 : vector<4x256xf32>
    %126 = arith.addf %116, %125 : vector<4x256xf32>
    %127 = vector.extract_strided_slice %2 {offsets = [0, 9], sizes = [4, 1], strides = [1, 1]} : vector<4x36xf32> to vector<4x1xf32>
    %128 = vector.extract_strided_slice %120 {offsets = [1, 0], sizes = [1, 256], strides = [1, 1]} : vector<4x256xf32> to vector<1x256xf32>
    %129 = vector.broadcast %127 : vector<4x1xf32> to vector<4x256xf32>
    %130 = vector.broadcast %128 : vector<1x256xf32> to vector<4x256xf32>
    %131 = arith.mulf %129, %130 : vector<4x256xf32>
    %132 = arith.addf %126, %131 : vector<4x256xf32>
    %133 = vector.extract_strided_slice %2 {offsets = [0, 10], sizes = [4, 1], strides = [1, 1]} : vector<4x36xf32> to vector<4x1xf32>
    %134 = vector.extract_strided_slice %120 {offsets = [2, 0], sizes = [1, 256], strides = [1, 1]} : vector<4x256xf32> to vector<1x256xf32>
    %135 = vector.broadcast %133 : vector<4x1xf32> to vector<4x256xf32>
    %136 = vector.broadcast %134 : vector<1x256xf32> to vector<4x256xf32>
    %137 = arith.mulf %135, %136 : vector<4x256xf32>
    %138 = arith.addf %132, %137 : vector<4x256xf32>
    %139 = vector.extract_strided_slice %2 {offsets = [0, 11], sizes = [4, 1], strides = [1, 1]} : vector<4x36xf32> to vector<4x1xf32>
    %140 = vector.extract_strided_slice %120 {offsets = [3, 0], sizes = [1, 256], strides = [1, 1]} : vector<4x256xf32> to vector<1x256xf32>
    %141 = vector.broadcast %139 : vector<4x1xf32> to vector<4x256xf32>
    %142 = vector.broadcast %140 : vector<1x256xf32> to vector<4x256xf32>
    %143 = arith.mulf %141, %142 : vector<4x256xf32>
    %144 = arith.addf %138, %143 : vector<4x256xf32>
    %c2_i32 = arith.constant 2 : i32
    %145 = tpu.dynamic_rotate %59 by %c2_i32 dim 1 : vector<4x256xf32>, i32 -> vector<4x256xf32>
    %c3 = arith.constant 3 : index
    %c0_13 = arith.constant 0 : index
    %146 = vector.load %arg1[%c3, %c0_13] : memref<9x256xf32, #tpu.memory_space<vmem>>, vector<1x256xf32>
    %147 = vector.broadcast %146 : vector<1x256xf32> to vector<4x256xf32>
    %148 = arith.mulf %145, %147 : vector<4x256xf32>
    %149 = vector.extract_strided_slice %2 {offsets = [0, 12], sizes = [4, 1], strides = [1, 1]} : vector<4x36xf32> to vector<4x1xf32>
    %150 = vector.extract_strided_slice %148 {offsets = [0, 0], sizes = [1, 256], strides = [1, 1]} : vector<4x256xf32> to vector<1x256xf32>
    %151 = vector.broadcast %149 : vector<4x1xf32> to vector<4x256xf32>
    %152 = vector.broadcast %150 : vector<1x256xf32> to vector<4x256xf32>
    %153 = arith.mulf %151, %152 : vector<4x256xf32>
    %154 = arith.addf %144, %153 : vector<4x256xf32>
    %155 = vector.extract_strided_slice %2 {offsets = [0, 13], sizes = [4, 1], strides = [1, 1]} : vector<4x36xf32> to vector<4x1xf32>
    %156 = vector.extract_strided_slice %148 {offsets = [1, 0], sizes = [1, 256], strides = [1, 1]} : vector<4x256xf32> to vector<1x256xf32>
    %157 = vector.broadcast %155 : vector<4x1xf32> to vector<4x256xf32>
    %158 = vector.broadcast %156 : vector<1x256xf32> to vector<4x256xf32>
    %159 = arith.mulf %157, %158 : vector<4x256xf32>
    %160 = arith.addf %154, %159 : vector<4x256xf32>
    %161 = vector.extract_strided_slice %2 {offsets = [0, 14], sizes = [4, 1], strides = [1, 1]} : vector<4x36xf32> to vector<4x1xf32>
    %162 = vector.extract_strided_slice %148 {offsets = [2, 0], sizes = [1, 256], strides = [1, 1]} : vector<4x256xf32> to vector<1x256xf32>
    %163 = vector.broadcast %161 : vector<4x1xf32> to vector<4x256xf32>
    %164 = vector.broadcast %162 : vector<1x256xf32> to vector<4x256xf32>
    %165 = arith.mulf %163, %164 : vector<4x256xf32>
    %166 = arith.addf %160, %165 : vector<4x256xf32>
    %167 = vector.extract_strided_slice %2 {offsets = [0, 15], sizes = [4, 1], strides = [1, 1]} : vector<4x36xf32> to vector<4x1xf32>
    %168 = vector.extract_strided_slice %148 {offsets = [3, 0], sizes = [1, 256], strides = [1, 1]} : vector<4x256xf32> to vector<1x256xf32>
    %169 = vector.broadcast %167 : vector<4x1xf32> to vector<4x256xf32>
    %170 = vector.broadcast %168 : vector<1x256xf32> to vector<4x256xf32>
    %171 = arith.mulf %169, %170 : vector<4x256xf32>
    %172 = arith.addf %166, %171 : vector<4x256xf32>
    %173 = vector.extract_strided_slice %2 {offsets = [0, 16], sizes = [4, 1], strides = [1, 1]} : vector<4x36xf32> to vector<4x1xf32>
    %174 = vector.extract_strided_slice %59 {offsets = [0, 0], sizes = [1, 256], strides = [1, 1]} : vector<4x256xf32> to vector<1x256xf32>
    %175 = vector.broadcast %173 : vector<4x1xf32> to vector<4x256xf32>
    %176 = vector.broadcast %174 : vector<1x256xf32> to vector<4x256xf32>
    %177 = arith.mulf %175, %176 : vector<4x256xf32>
    %178 = arith.addf %172, %177 : vector<4x256xf32>
    %179 = vector.extract_strided_slice %2 {offsets = [0, 17], sizes = [4, 1], strides = [1, 1]} : vector<4x36xf32> to vector<4x1xf32>
    %180 = vector.extract_strided_slice %59 {offsets = [1, 0], sizes = [1, 256], strides = [1, 1]} : vector<4x256xf32> to vector<1x256xf32>
    %181 = vector.broadcast %179 : vector<4x1xf32> to vector<4x256xf32>
    %182 = vector.broadcast %180 : vector<1x256xf32> to vector<4x256xf32>
    %183 = arith.mulf %181, %182 : vector<4x256xf32>
    %184 = arith.addf %178, %183 : vector<4x256xf32>
    %185 = vector.extract_strided_slice %2 {offsets = [0, 18], sizes = [4, 1], strides = [1, 1]} : vector<4x36xf32> to vector<4x1xf32>
    %186 = vector.extract_strided_slice %59 {offsets = [2, 0], sizes = [1, 256], strides = [1, 1]} : vector<4x256xf32> to vector<1x256xf32>
    %187 = vector.broadcast %185 : vector<4x1xf32> to vector<4x256xf32>
    %188 = vector.broadcast %186 : vector<1x256xf32> to vector<4x256xf32>
    %189 = arith.mulf %187, %188 : vector<4x256xf32>
    %190 = arith.addf %184, %189 : vector<4x256xf32>
    %191 = vector.extract_strided_slice %2 {offsets = [0, 19], sizes = [4, 1], strides = [1, 1]} : vector<4x36xf32> to vector<4x1xf32>
    %192 = vector.extract_strided_slice %59 {offsets = [3, 0], sizes = [1, 256], strides = [1, 1]} : vector<4x256xf32> to vector<1x256xf32>
    %193 = vector.broadcast %191 : vector<4x1xf32> to vector<4x256xf32>
    %194 = vector.broadcast %192 : vector<1x256xf32> to vector<4x256xf32>
    %195 = arith.mulf %193, %194 : vector<4x256xf32>
    %196 = arith.addf %190, %195 : vector<4x256xf32>
    %c254_i32 = arith.constant 254 : i32
    %197 = tpu.dynamic_rotate %59 by %c254_i32 dim 1 : vector<4x256xf32>, i32 -> vector<4x256xf32>
    %c5 = arith.constant 5 : index
    %c0_14 = arith.constant 0 : index
    %198 = vector.load %arg1[%c5, %c0_14] : memref<9x256xf32, #tpu.memory_space<vmem>>, vector<1x256xf32>
    %199 = vector.broadcast %198 : vector<1x256xf32> to vector<4x256xf32>
    %200 = arith.mulf %197, %199 : vector<4x256xf32>
    %201 = vector.extract_strided_slice %2 {offsets = [0, 20], sizes = [4, 1], strides = [1, 1]} : vector<4x36xf32> to vector<4x1xf32>
    %202 = vector.extract_strided_slice %200 {offsets = [0, 0], sizes = [1, 256], strides = [1, 1]} : vector<4x256xf32> to vector<1x256xf32>
    %203 = vector.broadcast %201 : vector<4x1xf32> to vector<4x256xf32>
    %204 = vector.broadcast %202 : vector<1x256xf32> to vector<4x256xf32>
    %205 = arith.mulf %203, %204 : vector<4x256xf32>
    %206 = arith.addf %196, %205 : vector<4x256xf32>
    %207 = vector.extract_strided_slice %2 {offsets = [0, 21], sizes = [4, 1], strides = [1, 1]} : vector<4x36xf32> to vector<4x1xf32>
    %208 = vector.extract_strided_slice %200 {offsets = [1, 0], sizes = [1, 256], strides = [1, 1]} : vector<4x256xf32> to vector<1x256xf32>
    %209 = vector.broadcast %207 : vector<4x1xf32> to vector<4x256xf32>
    %210 = vector.broadcast %208 : vector<1x256xf32> to vector<4x256xf32>
    %211 = arith.mulf %209, %210 : vector<4x256xf32>
    %212 = arith.addf %206, %211 : vector<4x256xf32>
    %213 = vector.extract_strided_slice %2 {offsets = [0, 22], sizes = [4, 1], strides = [1, 1]} : vector<4x36xf32> to vector<4x1xf32>
    %214 = vector.extract_strided_slice %200 {offsets = [2, 0], sizes = [1, 256], strides = [1, 1]} : vector<4x256xf32> to vector<1x256xf32>
    %215 = vector.broadcast %213 : vector<4x1xf32> to vector<4x256xf32>
    %216 = vector.broadcast %214 : vector<1x256xf32> to vector<4x256xf32>
    %217 = arith.mulf %215, %216 : vector<4x256xf32>
    %218 = arith.addf %212, %217 : vector<4x256xf32>
    %219 = vector.extract_strided_slice %2 {offsets = [0, 23], sizes = [4, 1], strides = [1, 1]} : vector<4x36xf32> to vector<4x1xf32>
    %220 = vector.extract_strided_slice %200 {offsets = [3, 0], sizes = [1, 256], strides = [1, 1]} : vector<4x256xf32> to vector<1x256xf32>
    %221 = vector.broadcast %219 : vector<4x1xf32> to vector<4x256xf32>
    %222 = vector.broadcast %220 : vector<1x256xf32> to vector<4x256xf32>
    %223 = arith.mulf %221, %222 : vector<4x256xf32>
    %224 = arith.addf %218, %223 : vector<4x256xf32>
    %c226_i32 = arith.constant 226 : i32
    %225 = tpu.dynamic_rotate %59 by %c226_i32 dim 1 : vector<4x256xf32>, i32 -> vector<4x256xf32>
    %c6 = arith.constant 6 : index
    %c0_15 = arith.constant 0 : index
    %226 = vector.load %arg1[%c6, %c0_15] : memref<9x256xf32, #tpu.memory_space<vmem>>, vector<1x256xf32>
    %227 = vector.broadcast %226 : vector<1x256xf32> to vector<4x256xf32>
    %228 = arith.mulf %225, %227 : vector<4x256xf32>
    %229 = vector.extract_strided_slice %2 {offsets = [0, 24], sizes = [4, 1], strides = [1, 1]} : vector<4x36xf32> to vector<4x1xf32>
    %230 = vector.extract_strided_slice %228 {offsets = [0, 0], sizes = [1, 256], strides = [1, 1]} : vector<4x256xf32> to vector<1x256xf32>
    %231 = vector.broadcast %229 : vector<4x1xf32> to vector<4x256xf32>
    %232 = vector.broadcast %230 : vector<1x256xf32> to vector<4x256xf32>
    %233 = arith.mulf %231, %232 : vector<4x256xf32>
    %234 = arith.addf %224, %233 : vector<4x256xf32>
    %235 = vector.extract_strided_slice %2 {offsets = [0, 25], sizes = [4, 1], strides = [1, 1]} : vector<4x36xf32> to vector<4x1xf32>
    %236 = vector.extract_strided_slice %228 {offsets = [1, 0], sizes = [1, 256], strides = [1, 1]} : vector<4x256xf32> to vector<1x256xf32>
    %237 = vector.broadcast %235 : vector<4x1xf32> to vector<4x256xf32>
    %238 = vector.broadcast %236 : vector<1x256xf32> to vector<4x256xf32>
    %239 = arith.mulf %237, %238 : vector<4x256xf32>
    %240 = arith.addf %234, %239 : vector<4x256xf32>
    %241 = vector.extract_strided_slice %2 {offsets = [0, 26], sizes = [4, 1], strides = [1, 1]} : vector<4x36xf32> to vector<4x1xf32>
    %242 = vector.extract_strided_slice %228 {offsets = [2, 0], sizes = [1, 256], strides = [1, 1]} : vector<4x256xf32> to vector<1x256xf32>
    %243 = vector.broadcast %241 : vector<4x1xf32> to vector<4x256xf32>
    %244 = vector.broadcast %242 : vector<1x256xf32> to vector<4x256xf32>
    %245 = arith.mulf %243, %244 : vector<4x256xf32>
    %246 = arith.addf %240, %245 : vector<4x256xf32>
    %247 = vector.extract_strided_slice %2 {offsets = [0, 27], sizes = [4, 1], strides = [1, 1]} : vector<4x36xf32> to vector<4x1xf32>
    %248 = vector.extract_strided_slice %228 {offsets = [3, 0], sizes = [1, 256], strides = [1, 1]} : vector<4x256xf32> to vector<1x256xf32>
    %249 = vector.broadcast %247 : vector<4x1xf32> to vector<4x256xf32>
    %250 = vector.broadcast %248 : vector<1x256xf32> to vector<4x256xf32>
    %251 = arith.mulf %249, %250 : vector<4x256xf32>
    %252 = arith.addf %246, %251 : vector<4x256xf32>
    %c224_i32 = arith.constant 224 : i32
    %253 = tpu.dynamic_rotate %59 by %c224_i32 dim 1 : vector<4x256xf32>, i32 -> vector<4x256xf32>
    %c7 = arith.constant 7 : index
    %c0_16 = arith.constant 0 : index
    %254 = vector.load %arg1[%c7, %c0_16] : memref<9x256xf32, #tpu.memory_space<vmem>>, vector<1x256xf32>
    %255 = vector.broadcast %254 : vector<1x256xf32> to vector<4x256xf32>
    %256 = arith.mulf %253, %255 : vector<4x256xf32>
    %257 = vector.extract_strided_slice %2 {offsets = [0, 28], sizes = [4, 1], strides = [1, 1]} : vector<4x36xf32> to vector<4x1xf32>
    %258 = vector.extract_strided_slice %256 {offsets = [0, 0], sizes = [1, 256], strides = [1, 1]} : vector<4x256xf32> to vector<1x256xf32>
    %259 = vector.broadcast %257 : vector<4x1xf32> to vector<4x256xf32>
    %260 = vector.broadcast %258 : vector<1x256xf32> to vector<4x256xf32>
    %261 = arith.mulf %259, %260 : vector<4x256xf32>
    %262 = arith.addf %252, %261 : vector<4x256xf32>
    %263 = vector.extract_strided_slice %2 {offsets = [0, 29], sizes = [4, 1], strides = [1, 1]} : vector<4x36xf32> to vector<4x1xf32>
    %264 = vector.extract_strided_slice %256 {offsets = [1, 0], sizes = [1, 256], strides = [1, 1]} : vector<4x256xf32> to vector<1x256xf32>
    %265 = vector.broadcast %263 : vector<4x1xf32> to vector<4x256xf32>
    %266 = vector.broadcast %264 : vector<1x256xf32> to vector<4x256xf32>
    %267 = arith.mulf %265, %266 : vector<4x256xf32>
    %268 = arith.addf %262, %267 : vector<4x256xf32>
    %269 = vector.extract_strided_slice %2 {offsets = [0, 30], sizes = [4, 1], strides = [1, 1]} : vector<4x36xf32> to vector<4x1xf32>
    %270 = vector.extract_strided_slice %256 {offsets = [2, 0], sizes = [1, 256], strides = [1, 1]} : vector<4x256xf32> to vector<1x256xf32>
    %271 = vector.broadcast %269 : vector<4x1xf32> to vector<4x256xf32>
    %272 = vector.broadcast %270 : vector<1x256xf32> to vector<4x256xf32>
    %273 = arith.mulf %271, %272 : vector<4x256xf32>
    %274 = arith.addf %268, %273 : vector<4x256xf32>
    %275 = vector.extract_strided_slice %2 {offsets = [0, 31], sizes = [4, 1], strides = [1, 1]} : vector<4x36xf32> to vector<4x1xf32>
    %276 = vector.extract_strided_slice %256 {offsets = [3, 0], sizes = [1, 256], strides = [1, 1]} : vector<4x256xf32> to vector<1x256xf32>
    %277 = vector.broadcast %275 : vector<4x1xf32> to vector<4x256xf32>
    %278 = vector.broadcast %276 : vector<1x256xf32> to vector<4x256xf32>
    %279 = arith.mulf %277, %278 : vector<4x256xf32>
    %280 = arith.addf %274, %279 : vector<4x256xf32>
    %c222_i32 = arith.constant 222 : i32
    %281 = tpu.dynamic_rotate %59 by %c222_i32 dim 1 : vector<4x256xf32>, i32 -> vector<4x256xf32>
    %c8 = arith.constant 8 : index
    %c0_17 = arith.constant 0 : index
    %282 = vector.load %arg1[%c8, %c0_17] : memref<9x256xf32, #tpu.memory_space<vmem>>, vector<1x256xf32>
    %283 = vector.broadcast %282 : vector<1x256xf32> to vector<4x256xf32>
    %284 = arith.mulf %281, %283 : vector<4x256xf32>
    %285 = vector.extract_strided_slice %2 {offsets = [0, 32], sizes = [4, 1], strides = [1, 1]} : vector<4x36xf32> to vector<4x1xf32>
    %286 = vector.extract_strided_slice %284 {offsets = [0, 0], sizes = [1, 256], strides = [1, 1]} : vector<4x256xf32> to vector<1x256xf32>
    %287 = vector.broadcast %285 : vector<4x1xf32> to vector<4x256xf32>
    %288 = vector.broadcast %286 : vector<1x256xf32> to vector<4x256xf32>
    %289 = arith.mulf %287, %288 : vector<4x256xf32>
    %290 = arith.addf %280, %289 : vector<4x256xf32>
    %291 = vector.extract_strided_slice %2 {offsets = [0, 33], sizes = [4, 1], strides = [1, 1]} : vector<4x36xf32> to vector<4x1xf32>
    %292 = vector.extract_strided_slice %284 {offsets = [1, 0], sizes = [1, 256], strides = [1, 1]} : vector<4x256xf32> to vector<1x256xf32>
    %293 = vector.broadcast %291 : vector<4x1xf32> to vector<4x256xf32>
    %294 = vector.broadcast %292 : vector<1x256xf32> to vector<4x256xf32>
    %295 = arith.mulf %293, %294 : vector<4x256xf32>
    %296 = arith.addf %290, %295 : vector<4x256xf32>
    %297 = vector.extract_strided_slice %2 {offsets = [0, 34], sizes = [4, 1], strides = [1, 1]} : vector<4x36xf32> to vector<4x1xf32>
    %298 = vector.extract_strided_slice %284 {offsets = [2, 0], sizes = [1, 256], strides = [1, 1]} : vector<4x256xf32> to vector<1x256xf32>
    %299 = vector.broadcast %297 : vector<4x1xf32> to vector<4x256xf32>
    %300 = vector.broadcast %298 : vector<1x256xf32> to vector<4x256xf32>
    %301 = arith.mulf %299, %300 : vector<4x256xf32>
    %302 = arith.addf %296, %301 : vector<4x256xf32>
    %303 = vector.extract_strided_slice %2 {offsets = [0, 35], sizes = [4, 1], strides = [1, 1]} : vector<4x36xf32> to vector<4x1xf32>
    %304 = vector.extract_strided_slice %284 {offsets = [3, 0], sizes = [1, 256], strides = [1, 1]} : vector<4x256xf32> to vector<1x256xf32>
    %305 = vector.broadcast %303 : vector<4x1xf32> to vector<4x256xf32>
    %306 = vector.broadcast %304 : vector<1x256xf32> to vector<4x256xf32>
    %307 = arith.mulf %305, %306 : vector<4x256xf32>
    %308 = arith.addf %302, %307 : vector<4x256xf32>
    %309 = vector.extract_strided_slice %3 {offsets = [0, 1], sizes = [4, 1], strides = [1, 1]} : vector<8x4xf32> to vector<4x1xf32>
    %310 = vector.broadcast %309 : vector<4x1xf32> to vector<4x256xf32>
    %311 = arith.addf %308, %310 : vector<4x256xf32>
    %cst_18 = arith.constant 0.000000e+00 : f32
    %312 = vector.broadcast %cst_18 : f32 to vector<4x256xf32>
    %313 = arith.maximumf %311, %312 : vector<4x256xf32>
    %314 = vector.extract_strided_slice %3 {offsets = [0, 2], sizes = [4, 1], strides = [1, 1]} : vector<8x4xf32> to vector<4x1xf32>
    %315 = arith.addf %313, %58 : vector<4x256xf32>
    %316 = vector.broadcast %314 : vector<4x1xf32> to vector<4x256xf32>
    %317 = arith.mulf %316, %315 : vector<4x256xf32>
    %318 = vector.extract_strided_slice %3 {offsets = [0, 3], sizes = [4, 1], strides = [1, 1]} : vector<8x4xf32> to vector<4x1xf32>
    %319 = vector.broadcast %318 : vector<4x1xf32> to vector<4x256xf32>
    %320 = arith.addf %317, %319 : vector<4x256xf32>
    %c0_19 = arith.constant 0 : index
    %c0_20 = arith.constant 0 : index
    %321 = vector.load %arg5[%c0_19, %c0_20] : memref<4x256xf32, #tpu.memory_space<vmem>>, vector<4x256xf32>
    tpu.vector_store %arg5[%c0_19, %c0_20], %320 {strides = array<i32>} : memref<4x256xf32, #tpu.memory_space<vmem>>, vector<4x256xf32>,
    return
  }
}

</mosaic_0001>

<llo_original>
// kernel: resnet_conv2d_block.1
$region0: #{resnet_conv2d_block.1}
  #allocation0 [shape = 'u32[]', space=smem, size = 0x4, offset = 0x4, fixed_abs, tag = 'smem constant byte address 0x4 - core index']
  #allocation1 [shape = 'u32[144,128]{1,0:T(1,128)}', space=vmem, size = 0x12000, scoped, tag = 'internal scratch']
  %s0 = inlined_call_operand.vmem [shape: f32[8,256], index: 0, kind: input, shape index: {}]
  %s1 = inlined_call_operand.vmem [shape: f32[9,256], index: 1, kind: input, shape index: {}]
  %s2 = inlined_call_operand.vmem [shape: f32[8,8], index: 2, kind: input, shape index: {}]
  %s3 = inlined_call_operand.vmem [shape: f32[4,36], index: 3, kind: input, shape index: {}]
  %s4 = inlined_call_operand.vmem [shape: f32[8,4], index: 4, kind: input, shape index: {}]
  %s5 = inlined_call_operand.vmem [shape: f32[4,256], index: 5, kind: output, shape index: {}]
  %s6 = sld [smem:[#allocation0]]
  $region30: #{resnet_conv2d_block.1} parent=0
    _
  %s8 = ssub.s32 1, %s6
  %s9 = scalar_select 0, %s8, %s6
  // Predicated region
  $region2: #{resnet_conv2d_block.1} parent=0 // pred_check
    _
  $region3: #{resnet_conv2d_block.1} parent=0 // pred_check_branch
    %11 = sbr.rel (0) target = $region5
  $region4: #{resnet_conv2d_block.1} parent=0 // pred_region
    _
  $region5: #{resnet_conv2d_block.1} parent=0 // pred_fallthru
    _
  // Predicated region
  $region6: #{resnet_conv2d_block.1} parent=0 // pred_check
    _
  $region7: #{resnet_conv2d_block.1} parent=0 // pred_check_branch
    %13 = sbr.rel (0) target = $region9
  $region8: #{resnet_conv2d_block.1} parent=0 // pred_region
    _
  $region9: #{resnet_conv2d_block.1} parent=0 // pred_fallthru
    _
  // Predicated region
  $region10: #{resnet_conv2d_block.1} parent=0 // pred_check
    _
  $region11: #{resnet_conv2d_block.1} parent=0 // pred_check_branch
    %15 = sbr.rel (0) target = $region13
  $region12: #{resnet_conv2d_block.1} parent=0 // pred_region
    _
  $region13: #{resnet_conv2d_block.1} parent=0 // pred_fallthru
    _
  // Predicated region
  $region14: #{resnet_conv2d_block.1} parent=0 // pred_check
    _
  $region15: #{resnet_conv2d_block.1} parent=0 // pred_check_branch
    %17 = sbr.rel (0) target = $region17
  $region16: #{resnet_conv2d_block.1} parent=0 // pred_region
    _
  $region17: #{resnet_conv2d_block.1} parent=0 // pred_fallthru
    _
  // Predicated region
  $region18: #{resnet_conv2d_block.1} parent=0 // pred_check
    _
  $region19: #{resnet_conv2d_block.1} parent=0 // pred_check_branch
    %19 = sbr.rel (0) target = $region21
  $region20: #{resnet_conv2d_block.1} parent=0 // pred_region
    _
  $region21: #{resnet_conv2d_block.1} parent=0 // pred_fallthru
    _
  %v20 = vld [vmem:[%s0] sm:$0xff]
  %v21 = vld [vmem:[%s0 + $0x8] sm:$0xff]
  %v22 = vld [vmem:[%s2] sm:$0xff]
  %v23 = vld [vmem:[%s3] sm:$0xf]
  %v24 = vld [vmem:[%s4] sm:$0xff]
  %26 = vset.pattern.permute.xlu0 0
  %27 = vperm.xlu0 %26, %v22
  %v28 = vpop.permute.xlu0 %27
  %v30 = vlaneseq
  %v31 = vshrl.u32 %v30, 7
  %v32 = vsub.s32 0, %v31
  %v33 = vrot.slane %v20, %v32
  %v34 = vlaneseq
  %v35 = vshrl.u32 %v34, 7
  %v36 = vsub.s32 0, %v35
  %v37 = vrot.slane %v21, %v36
  %v38 = vmul.f32 %v28, %v33
  %v39 = vmul.f32 %v28, %v37
  %v40 = vadd.f32 %v38, 0.0
  %v41 = vadd.f32 %v39, 0.0
  %42 = vset.pattern.permute.xlu0 1
  %43 = vperm.xlu0 %42, %v22
  %v44 = vpop.permute.xlu0 %43
  %v46 = vlaneseq
  %v47 = vshrl.u32 %v46, 7
  %v48 = vsub.s32 1, %v47
  %v49 = vrot.slane %v20, %v48
  %v50 = vlaneseq
  %v51 = vshrl.u32 %v50, 7
  %v52 = vsub.s32 1, %v51
  %v53 = vrot.slane %v21, %v52
  %v54 = vmul.f32 %v44, %v49
  %v55 = vmul.f32 %v44, %v53
  %v56 = vadd.f32 %v40, %v54
  %v57 = vadd.f32 %v41, %v55
  %58 = vset.pattern.permute.xlu0 2
  %59 = vperm.xlu0 %58, %v22
  %v60 = vpop.permute.xlu0 %59
  %v62 = vlaneseq
  %v63 = vshrl.u32 %v62, 7
  %v64 = vsub.s32 2, %v63
  %v65 = vrot.slane %v20, %v64
  %v66 = vlaneseq
  %v67 = vshrl.u32 %v66, 7
  %v68 = vsub.s32 2, %v67
  %v69 = vrot.slane %v21, %v68
  %v70 = vmul.f32 %v60, %v65
  %v71 = vmul.f32 %v60, %v69
  %v72 = vadd.f32 %v56, %v70
  %v73 = vadd.f32 %v57, %v71
  %74 = vset.pattern.permute.xlu0 3
  %75 = vperm.xlu0 %74, %v22
  %v76 = vpop.permute.xlu0 %75
  %v78 = vlaneseq
  %v79 = vshrl.u32 %v78, 7
  %v80 = vsub.s32 3, %v79
  %v81 = vrot.slane %v20, %v80
  %v82 = vlaneseq
  %v83 = vshrl.u32 %v82, 7
  %v84 = vsub.s32 3, %v83
  %v85 = vrot.slane %v21, %v84
  %v86 = vmul.f32 %v76, %v81
  %v87 = vmul.f32 %v76, %v85
  %v88 = vadd.f32 %v72, %v86
  %v89 = vadd.f32 %v73, %v87
  %90 = vset.pattern.permute.xlu0 4
  %91 = vperm.xlu0 %90, %v22
  %v92 = vpop.permute.xlu0 %91
  %v94 = vlaneseq
  %v95 = vshrl.u32 %v94, 7
  %v96 = vsub.s32 4, %v95
  %v97 = vrot.slane %v20, %v96
  %v98 = vlaneseq
  %v99 = vshrl.u32 %v98, 7
  %v100 = vsub.s32 4, %v99
  %v101 = vrot.slane %v21, %v100
  %v102 = vmul.f32 %v92, %v97
  %v103 = vmul.f32 %v92, %v101
  %v104 = vadd.f32 %v88, %v102
  %v105 = vadd.f32 %v89, %v103
  %106 = vset.pattern.permute.xlu0 5
  %107 = vperm.xlu0 %106, %v22
  %v108 = vpop.permute.xlu0 %107
  %v110 = vlaneseq
  %v111 = vshrl.u32 %v110, 7
  %v112 = vsub.s32 5, %v111
  %v113 = vrot.slane %v20, %v112
  %v114 = vlaneseq
  %v115 = vshrl.u32 %v114, 7
  %v116 = vsub.s32 5, %v115
  %v117 = vrot.slane %v21, %v116
  %v118 = vmul.f32 %v108, %v113
  %v119 = vmul.f32 %v108, %v117
  %v120 = vadd.f32 %v104, %v118
  %v121 = vadd.f32 %v105, %v119
  %122 = vset.pattern.permute.xlu0 6
  %123 = vperm.xlu0 %122, %v22
  %v124 = vpop.permute.xlu0 %123
  %v126 = vlaneseq
  %v127 = vshrl.u32 %v126, 7
  %v128 = vsub.s32 6, %v127
  %v129 = vrot.slane %v20, %v128
  %v130 = vlaneseq
  %v131 = vshrl.u32 %v130, 7
  %v132 = vsub.s32 6, %v131
  %v133 = vrot.slane %v21, %v132
  %v134 = vmul.f32 %v124, %v129
  %v135 = vmul.f32 %v124, %v133
  %v136 = vadd.f32 %v120, %v134
  %v137 = vadd.f32 %v121, %v135
  %138 = vset.pattern.permute.xlu0 7
  %139 = vperm.xlu0 %138, %v22
  %v140 = vpop.permute.xlu0 %139
  %v142 = vlaneseq
  %v143 = vshrl.u32 %v142, 7
  %v144 = vsub.s32 7, %v143
  %v145 = vrot.slane %v20, %v144
  %v146 = vlaneseq
  %v147 = vshrl.u32 %v146, 7
  %v148 = vsub.s32 7, %v147
  %v149 = vrot.slane %v21, %v148
  %v150 = vmul.f32 %v140, %v145
  %v151 = vmul.f32 %v140, %v149
  %v152 = vadd.f32 %v136, %v150
  %v153 = vadd.f32 %v137, %v151
  %155 = vset.pattern.permute.xlu0 0
  %156 = vperm.xlu0 %155, %v24
  %v157 = vpop.permute.xlu0 %156
  %v159 = vadd.f32 %v152, %v157
  %v160 = vadd.f32 %v153, %v157
  %v161 = vmax.f32 %v159, 0.0
  %v162 = vmax.f32 %v160, 0.0
  %v165 = vrot.slane %v161, 4
  %v166 = vrot.slane %v162, 4
  %169 = vrot.lane.b32.xlu0 %v165, 34
  %v170 = vpop.permute.xlu0 %169
  %171 = vrot.lane.b32.xlu0 %v166, 34
  %v172 = vpop.permute.xlu0 %171
  %v173 = vlaneseq
  %v174 = vand.u32 %v173, 127
  %vm175 = vcmp.lt.s32.totalorder %v174, 34
  %v176 = vsel %vm175, %v170, %v172
  %v177 = vsel %vm175, %v172, %v170
  %v178 = vld [vmem:[%s1] ss:$8 sm:$0x3]
  %v180 = vlaneseq
  %v181 = vshrl.u32 %v180, 7
  %v182 = vsub.s32 0, %v181
  %v183 = vrot.slane %v178, %v182
  %v184 = vlaneseq
  %v185 = vshrl.u32 %v184, 7
  %v186 = vsub.s32 1, %v185
  %v187 = vrot.slane %v178, %v186
  %v190 = vmul.f32 %v177, %v183
  %v191 = vmul.f32 %v176, %v187
  %193 = vset.pattern.permute.xlu0 0
  %194 = vperm.xlu0 %193, %v23
  %v195 = vpop.permute.xlu0 %194
  %v197 = vlaneseq
  %v198 = vshrl.u32 %v197, 7
  %v199 = vsub.s32 0, %v198
  %v200 = vrot.slane %v190, %v199
  %v201 = vlaneseq
  %v202 = vshrl.u32 %v201, 7
  %v203 = vsub.s32 0, %v202
  %v204 = vrot.slane %v191, %v203
  %v205 = vmul.f32 %v195, %v200
  %v206 = vmul.f32 %v195, %v204
  %v207 = vadd.f32 %v205, 0.0
  %v208 = vadd.f32 %v206, 0.0
  %209 = vset.pattern.permute.xlu0 1
  %210 = vperm.xlu0 %209, %v23
  %v211 = vpop.permute.xlu0 %210
  %v213 = vlaneseq
  %v214 = vshrl.u32 %v213, 7
  %v215 = vsub.s32 1, %v214
  %v216 = vrot.slane %v190, %v215
  %v217 = vlaneseq
  %v218 = vshrl.u32 %v217, 7
  %v219 = vsub.s32 1, %v218
  %v220 = vrot.slane %v191, %v219
  %v221 = vmul.f32 %v211, %v216
  %v222 = vmul.f32 %v211, %v220
  %v223 = vadd.f32 %v207, %v221
  %v224 = vadd.f32 %v208, %v222
  %225 = vset.pattern.permute.xlu0 2
  %226 = vperm.xlu0 %225, %v23
  %v227 = vpop.permute.xlu0 %226
  %v229 = vlaneseq
  %v230 = vshrl.u32 %v229, 7
  %v231 = vsub.s32 2, %v230
  %v232 = vrot.slane %v190, %v231
  %v233 = vlaneseq
  %v234 = vshrl.u32 %v233, 7
  %v235 = vsub.s32 2, %v234
  %v236 = vrot.slane %v191, %v235
  %v237 = vmul.f32 %v227, %v232
  %v238 = vmul.f32 %v227, %v236
  %v239 = vadd.f32 %v223, %v237
  %v240 = vadd.f32 %v224, %v238
  %241 = vset.pattern.permute.xlu0 3
  %242 = vperm.xlu0 %241, %v23
  %v243 = vpop.permute.xlu0 %242
  %v245 = vlaneseq
  %v246 = vshrl.u32 %v245, 7
  %v247 = vsub.s32 3, %v246
  %v248 = vrot.slane %v190, %v247
  %v249 = vlaneseq
  %v250 = vshrl.u32 %v249, 7
  %v251 = vsub.s32 3, %v250
  %v252 = vrot.slane %v191, %v251
  %v253 = vmul.f32 %v243, %v248
  %v254 = vmul.f32 %v243, %v252
  %v255 = vadd.f32 %v239, %v253
  %v256 = vadd.f32 %v240, %v254
  %257 = vrot.lane.b32.xlu0 %v165, 32
  %v258 = vpop.permute.xlu0 %257
  %259 = vrot.lane.b32.xlu0 %v166, 32
  %v260 = vpop.permute.xlu0 %259
  %vm261 = vcmp.lt.s32.totalorder %v174, 32
  %v262 = vsel %vm261, %v258, %v260
  %v263 = vsel %vm261, %v260, %v258
  %s264 = scalar_lea.vmem %s1, 1
  %v265 = vld [vmem:[%s264] ss:$8 sm:$0x3]
  %v267 = vlaneseq
  %v268 = vshrl.u32 %v267, 7
  %v269 = vsub.s32 0, %v268
  %v270 = vrot.slane %v265, %v269
  %v271 = vlaneseq
  %v272 = vshrl.u32 %v271, 7
  %v273 = vsub.s32 1, %v272
  %v274 = vrot.slane %v265, %v273
  %v277 = vmul.f32 %v263, %v270
  %v278 = vmul.f32 %v262, %v274
  %279 = vset.pattern.permute.xlu0 4
  %280 = vperm.xlu0 %279, %v23
  %v281 = vpop.permute.xlu0 %280
  %v283 = vlaneseq
  %v284 = vshrl.u32 %v283, 7
  %v285 = vsub.s32 0, %v284
  %v286 = vrot.slane %v277, %v285
  %v287 = vlaneseq
  %v288 = vshrl.u32 %v287, 7
  %v289 = vsub.s32 0, %v288
  %v290 = vrot.slane %v278, %v289
  %v291 = vmul.f32 %v281, %v286
  %v292 = vmul.f32 %v281, %v290
  %v293 = vadd.f32 %v255, %v291
  %v294 = vadd.f32 %v256, %v292
  %295 = vset.pattern.permute.xlu0 5
  %296 = vperm.xlu0 %295, %v23
  %v297 = vpop.permute.xlu0 %296
  %v299 = vlaneseq
  %v300 = vshrl.u32 %v299, 7
  %v301 = vsub.s32 1, %v300
  %v302 = vrot.slane %v277, %v301
  %v303 = vlaneseq
  %v304 = vshrl.u32 %v303, 7
  %v305 = vsub.s32 1, %v304
  %v306 = vrot.slane %v278, %v305
  %v307 = vmul.f32 %v297, %v302
  %v308 = vmul.f32 %v297, %v306
  %v309 = vadd.f32 %v293, %v307
  %v310 = vadd.f32 %v294, %v308
  %311 = vset.pattern.permute.xlu0 6
  %312 = vperm.xlu0 %311, %v23
  %v313 = vpop.permute.xlu0 %312
  %v315 = vlaneseq
  %v316 = vshrl.u32 %v315, 7
  %v317 = vsub.s32 2, %v316
  %v318 = vrot.slane %v277, %v317
  %v319 = vlaneseq
  %v320 = vshrl.u32 %v319, 7
  %v321 = vsub.s32 2, %v320
  %v322 = vrot.slane %v278, %v321
  %v323 = vmul.f32 %v313, %v318
  %v324 = vmul.f32 %v313, %v322
  %v325 = vadd.f32 %v309, %v323
  %v326 = vadd.f32 %v310, %v324
  %327 = vset.pattern.permute.xlu0 7
  %328 = vperm.xlu0 %327, %v23
  %v329 = vpop.permute.xlu0 %328
  %v331 = vlaneseq
  %v332 = vshrl.u32 %v331, 7
  %v333 = vsub.s32 3, %v332
  %v334 = vrot.slane %v277, %v333
  %v335 = vlaneseq
  %v336 = vshrl.u32 %v335, 7
  %v337 = vsub.s32 3, %v336
  %v338 = vrot.slane %v278, %v337
  %v339 = vmul.f32 %v329, %v334
  %v340 = vmul.f32 %v329, %v338
  %v341 = vadd.f32 %v325, %v339
  %v342 = vadd.f32 %v326, %v340
  %343 = vrot.lane.b32.xlu0 %v165, 30
  %v344 = vpop.permute.xlu0 %343
  %345 = vrot.lane.b32.xlu0 %v166, 30
  %v346 = vpop.permute.xlu0 %345
  %vm347 = vcmp.lt.s32.totalorder %v174, 30
  %v348 = vsel %vm347, %v344, %v346
  %v349 = vsel %vm347, %v346, %v344
  %s350 = scalar_lea.vmem %s1, 2
  %v351 = vld [vmem:[%s350] ss:$8 sm:$0x3]
  %v353 = vlaneseq
  %v354 = vshrl.u32 %v353, 7
  %v355 = vsub.s32 0, %v354
  %v356 = vrot.slane %v351, %v355
  %v357 = vlaneseq
  %v358 = vshrl.u32 %v357, 7
  %v359 = vsub.s32 1, %v358
  %v360 = vrot.slane %v351, %v359
  %v363 = vmul.f32 %v349, %v356
  %v364 = vmul.f32 %v348, %v360
  %365 = vset.pattern.permute.xlu0 8
  %366 = vperm.xlu0 %365, %v23
  %v367 = vpop.permute.xlu0 %366
  %v369 = vlaneseq
  %v370 = vshrl.u32 %v369, 7
  %v371 = vsub.s32 0, %v370
  %v372 = vrot.slane %v363, %v371
  %v373 = vlaneseq
  %v374 = vshrl.u32 %v373, 7
  %v375 = vsub.s32 0, %v374
  %v376 = vrot.slane %v364, %v375
  %v377 = vmul.f32 %v367, %v372
  %v378 = vmul.f32 %v367, %v376
  %v379 = vadd.f32 %v341, %v377
  %v380 = vadd.f32 %v342, %v378
  %381 = vset.pattern.permute.xlu0 9
  %382 = vperm.xlu0 %381, %v23
  %v383 = vpop.permute.xlu0 %382
  %v385 = vlaneseq
  %v386 = vshrl.u32 %v385, 7
  %v387 = vsub.s32 1, %v386
  %v388 = vrot.slane %v363, %v387
  %v389 = vlaneseq
  %v390 = vshrl.u32 %v389, 7
  %v391 = vsub.s32 1, %v390
  %v392 = vrot.slane %v364, %v391
  %v393 = vmul.f32 %v383, %v388
  %v394 = vmul.f32 %v383, %v392
  %v395 = vadd.f32 %v379, %v393
  %v396 = vadd.f32 %v380, %v394
  %397 = vset.pattern.permute.xlu0 10
  %398 = vperm.xlu0 %397, %v23
  %v399 = vpop.permute.xlu0 %398
  %v401 = vlaneseq
  %v402 = vshrl.u32 %v401, 7
  %v403 = vsub.s32 2, %v402
  %v404 = vrot.slane %v363, %v403
  %v405 = vlaneseq
  %v406 = vshrl.u32 %v405, 7
  %v407 = vsub.s32 2, %v406
  %v408 = vrot.slane %v364, %v407
  %v409 = vmul.f32 %v399, %v404
  %v410 = vmul.f32 %v399, %v408
  %v411 = vadd.f32 %v395, %v409
  %v412 = vadd.f32 %v396, %v410
  %413 = vset.pattern.permute.xlu0 11
  %414 = vperm.xlu0 %413, %v23
  %v415 = vpop.permute.xlu0 %414
  %v417 = vlaneseq
  %v418 = vshrl.u32 %v417, 7
  %v419 = vsub.s32 3, %v418
  %v420 = vrot.slane %v363, %v419
  %v421 = vlaneseq
  %v422 = vshrl.u32 %v421, 7
  %v423 = vsub.s32 3, %v422
  %v424 = vrot.slane %v364, %v423
  %v425 = vmul.f32 %v415, %v420
  %v426 = vmul.f32 %v415, %v424
  %v427 = vadd.f32 %v411, %v425
  %v428 = vadd.f32 %v412, %v426
  %429 = vrot.lane.b32.xlu0 %v165, 2
  %v430 = vpop.permute.xlu0 %429
  %431 = vrot.lane.b32.xlu0 %v166, 2
  %v432 = vpop.permute.xlu0 %431
  %vm433 = vcmp.lt.s32.totalorder %v174, 2
  %v434 = vsel %vm433, %v430, %v432
  %v435 = vsel %vm433, %v432, %v430
  %s436 = scalar_lea.vmem %s1, 3
  %v437 = vld [vmem:[%s436] ss:$8 sm:$0x3]
  %v439 = vlaneseq
  %v440 = vshrl.u32 %v439, 7
  %v441 = vsub.s32 0, %v440
  %v442 = vrot.slane %v437, %v441
  %v443 = vlaneseq
  %v444 = vshrl.u32 %v443, 7
  %v445 = vsub.s32 1, %v444
  %v446 = vrot.slane %v437, %v445
  %v449 = vmul.f32 %v435, %v442
  %v450 = vmul.f32 %v434, %v446
  %451 = vset.pattern.permute.xlu0 12
  %452 = vperm.xlu0 %451, %v23
  %v453 = vpop.permute.xlu0 %452
  %v455 = vlaneseq
  %v456 = vshrl.u32 %v455, 7
  %v457 = vsub.s32 0, %v456
  %v458 = vrot.slane %v449, %v457
  %v459 = vlaneseq
  %v460 = vshrl.u32 %v459, 7
  %v461 = vsub.s32 0, %v460
  %v462 = vrot.slane %v450, %v461
  %v463 = vmul.f32 %v453, %v458
  %v464 = vmul.f32 %v453, %v462
  %v465 = vadd.f32 %v427, %v463
  %v466 = vadd.f32 %v428, %v464
  %467 = vset.pattern.permute.xlu0 13
  %468 = vperm.xlu0 %467, %v23
  %v469 = vpop.permute.xlu0 %468
  %v471 = vlaneseq
  %v472 = vshrl.u32 %v471, 7
  %v473 = vsub.s32 1, %v472
  %v474 = vrot.slane %v449, %v473
  %v475 = vlaneseq
  %v476 = vshrl.u32 %v475, 7
  %v477 = vsub.s32 1, %v476
  %v478 = vrot.slane %v450, %v477
  %v479 = vmul.f32 %v469, %v474
  %v480 = vmul.f32 %v469, %v478
  %v481 = vadd.f32 %v465, %v479
  %v482 = vadd.f32 %v466, %v480
  %483 = vset.pattern.permute.xlu0 14
  %484 = vperm.xlu0 %483, %v23
  %v485 = vpop.permute.xlu0 %484
  %v487 = vlaneseq
  %v488 = vshrl.u32 %v487, 7
  %v489 = vsub.s32 2, %v488
  %v490 = vrot.slane %v449, %v489
  %v491 = vlaneseq
  %v492 = vshrl.u32 %v491, 7
  %v493 = vsub.s32 2, %v492
  %v494 = vrot.slane %v450, %v493
  %v495 = vmul.f32 %v485, %v490
  %v496 = vmul.f32 %v485, %v494
  %v497 = vadd.f32 %v481, %v495
  %v498 = vadd.f32 %v482, %v496
  %499 = vset.pattern.permute.xlu0 15
  %500 = vperm.xlu0 %499, %v23
  %v501 = vpop.permute.xlu0 %500
  %v503 = vlaneseq
  %v504 = vshrl.u32 %v503, 7
  %v505 = vsub.s32 3, %v504
  %v506 = vrot.slane %v449, %v505
  %v507 = vlaneseq
  %v508 = vshrl.u32 %v507, 7
  %v509 = vsub.s32 3, %v508
  %v510 = vrot.slane %v450, %v509
  %v511 = vmul.f32 %v501, %v506
  %v512 = vmul.f32 %v501, %v510
  %v513 = vadd.f32 %v497, %v511
  %v514 = vadd.f32 %v498, %v512
  %515 = vset.pattern.permute.xlu0 16
  %516 = vperm.xlu0 %515, %v23
  %v517 = vpop.permute.xlu0 %516
  %v519 = vlaneseq
  %v520 = vshrl.u32 %v519, 7
  %v521 = vsub.s32 4, %v520
  %v522 = vrot.slane %v161, %v521
  %v523 = vlaneseq
  %v524 = vshrl.u32 %v523, 7
  %v525 = vsub.s32 4, %v524
  %v526 = vrot.slane %v162, %v525
  %v527 = vmul.f32 %v517, %v522
  %v528 = vmul.f32 %v517, %v526
  %v529 = vadd.f32 %v513, %v527
  %v530 = vadd.f32 %v514, %v528
  %531 = vset.pattern.permute.xlu0 17
  %532 = vperm.xlu0 %531, %v23
  %v533 = vpop.permute.xlu0 %532
  %v535 = vlaneseq
  %v536 = vshrl.u32 %v535, 7
  %v537 = vsub.s32 5, %v536
  %v538 = vrot.slane %v161, %v537
  %v539 = vlaneseq
  %v540 = vshrl.u32 %v539, 7
  %v541 = vsub.s32 5, %v540
  %v542 = vrot.slane %v162, %v541
  %v543 = vmul.f32 %v533, %v538
  %v544 = vmul.f32 %v533, %v542
  %v545 = vadd.f32 %v529, %v543
  %v546 = vadd.f32 %v530, %v544
  %547 = vset.pattern.permute.xlu0 18
  %548 = vperm.xlu0 %547, %v23
  %v549 = vpop.permute.xlu0 %548
  %v551 = vlaneseq
  %v552 = vshrl.u32 %v551, 7
  %v553 = vsub.s32 6, %v552
  %v554 = vrot.slane %v161, %v553
  %v555 = vlaneseq
  %v556 = vshrl.u32 %v555, 7
  %v557 = vsub.s32 6, %v556
  %v558 = vrot.slane %v162, %v557
  %v559 = vmul.f32 %v549, %v554
  %v560 = vmul.f32 %v549, %v558
  %v561 = vadd.f32 %v545, %v559
  %v562 = vadd.f32 %v546, %v560
  %563 = vset.pattern.permute.xlu0 19
  %564 = vperm.xlu0 %563, %v23
  %v565 = vpop.permute.xlu0 %564
  %v567 = vlaneseq
  %v568 = vshrl.u32 %v567, 7
  %v569 = vsub.s32 7, %v568
  %v570 = vrot.slane %v161, %v569
  %v571 = vlaneseq
  %v572 = vshrl.u32 %v571, 7
  %v573 = vsub.s32 7, %v572
  %v574 = vrot.slane %v162, %v573
  %v575 = vmul.f32 %v565, %v570
  %v576 = vmul.f32 %v565, %v574
  %v577 = vadd.f32 %v561, %v575
  %v578 = vadd.f32 %v562, %v576
  %579 = vrot.lane.b32.xlu0 %v165, 126
  %v580 = vpop.permute.xlu0 %579
  %581 = vrot.lane.b32.xlu0 %v166, 126
  %v582 = vpop.permute.xlu0 %581
  %vm583 = vcmp.lt.s32.totalorder %v174, 126
  %v584 = vsel %vm583, %v580, %v582
  %v585 = vsel %vm583, %v582, %v580
  %s586 = scalar_lea.vmem %s1, 5
  %v587 = vld [vmem:[%s586] ss:$8 sm:$0x3]
  %v589 = vlaneseq
  %v590 = vshrl.u32 %v589, 7
  %v591 = vsub.s32 0, %v590
  %v592 = vrot.slane %v587, %v591
  %v593 = vlaneseq
  %v594 = vshrl.u32 %v593, 7
  %v595 = vsub.s32 1, %v594
  %v596 = vrot.slane %v587, %v595
  %v599 = vmul.f32 %v584, %v592
  %v600 = vmul.f32 %v585, %v596
  %601 = vset.pattern.permute.xlu0 20
  %602 = vperm.xlu0 %601, %v23
  %v603 = vpop.permute.xlu0 %602
  %v605 = vlaneseq
  %v606 = vshrl.u32 %v605, 7
  %v607 = vsub.s32 0, %v606
  %v608 = vrot.slane %v599, %v607
  %v609 = vlaneseq
  %v610 = vshrl.u32 %v609, 7
  %v611 = vsub.s32 0, %v610
  %v612 = vrot.slane %v600, %v611
  %v613 = vmul.f32 %v603, %v608
  %v614 = vmul.f32 %v603, %v612
  %v615 = vadd.f32 %v577, %v613
  %v616 = vadd.f32 %v578, %v614
  %617 = vset.pattern.permute.xlu0 21
  %618 = vperm.xlu0 %617, %v23
  %v619 = vpop.permute.xlu0 %618
  %v621 = vlaneseq
  %v622 = vshrl.u32 %v621, 7
  %v623 = vsub.s32 1, %v622
  %v624 = vrot.slane %v599, %v623
  %v625 = vlaneseq
  %v626 = vshrl.u32 %v625, 7
  %v627 = vsub.s32 1, %v626
  %v628 = vrot.slane %v600, %v627
  %v629 = vmul.f32 %v619, %v624
  %v630 = vmul.f32 %v619, %v628
  %v631 = vadd.f32 %v615, %v629
  %v632 = vadd.f32 %v616, %v630
  %633 = vset.pattern.permute.xlu0 22
  %634 = vperm.xlu0 %633, %v23
  %v635 = vpop.permute.xlu0 %634
  %v637 = vlaneseq
  %v638 = vshrl.u32 %v637, 7
  %v639 = vsub.s32 2, %v638
  %v640 = vrot.slane %v599, %v639
  %v641 = vlaneseq
  %v642 = vshrl.u32 %v641, 7
  %v643 = vsub.s32 2, %v642
  %v644 = vrot.slane %v600, %v643
  %v645 = vmul.f32 %v635, %v640
  %v646 = vmul.f32 %v635, %v644
  %v647 = vadd.f32 %v631, %v645
  %v648 = vadd.f32 %v632, %v646
  %649 = vset.pattern.permute.xlu0 23
  %650 = vperm.xlu0 %649, %v23
  %v651 = vpop.permute.xlu0 %650
  %v653 = vlaneseq
  %v654 = vshrl.u32 %v653, 7
  %v655 = vsub.s32 3, %v654
  %v656 = vrot.slane %v599, %v655
  %v657 = vlaneseq
  %v658 = vshrl.u32 %v657, 7
  %v659 = vsub.s32 3, %v658
  %v660 = vrot.slane %v600, %v659
  %v661 = vmul.f32 %v651, %v656
  %v662 = vmul.f32 %v651, %v660
  %v663 = vadd.f32 %v647, %v661
  %v664 = vadd.f32 %v648, %v662
  %665 = vrot.lane.b32.xlu0 %v165, 98
  %v666 = vpop.permute.xlu0 %665
  %667 = vrot.lane.b32.xlu0 %v166, 98
  %v668 = vpop.permute.xlu0 %667
  %vm669 = vcmp.lt.s32.totalorder %v174, 98
  %v670 = vsel %vm669, %v666, %v668
  %v671 = vsel %vm669, %v668, %v666
  %s672 = scalar_lea.vmem %s1, 6
  %v673 = vld [vmem:[%s672] ss:$8 sm:$0x3]
  %v675 = vlaneseq
  %v676 = vshrl.u32 %v675, 7
  %v677 = vsub.s32 0, %v676
  %v678 = vrot.slane %v673, %v677
  %v679 = vlaneseq
  %v680 = vshrl.u32 %v679, 7
  %v681 = vsub.s32 1, %v680
  %v682 = vrot.slane %v673, %v681
  %v685 = vmul.f32 %v670, %v678
  %v686 = vmul.f32 %v671, %v682
  %687 = vset.pattern.permute.xlu0 24
  %688 = vperm.xlu0 %687, %v23
  %v689 = vpop.permute.xlu0 %688
  %v691 = vlaneseq
  %v692 = vshrl.u32 %v691, 7
  %v693 = vsub.s32 0, %v692
  %v694 = vrot.slane %v685, %v693
  %v695 = vlaneseq
  %v696 = vshrl.u32 %v695, 7
  %v697 = vsub.s32 0, %v696
  %v698 = vrot.slane %v686, %v697
  %v699 = vmul.f32 %v689, %v694
  %v700 = vmul.f32 %v689, %v698
  %v701 = vadd.f32 %v663, %v699
  %v702 = vadd.f32 %v664, %v700
  %703 = vset.pattern.permute.xlu0 25
  %704 = vperm.xlu0 %703, %v23
  %v705 = vpop.permute.xlu0 %704
  %v707 = vlaneseq
  %v708 = vshrl.u32 %v707, 7
  %v709 = vsub.s32 1, %v708
  %v710 = vrot.slane %v685, %v709
  %v711 = vlaneseq
  %v712 = vshrl.u32 %v711, 7
  %v713 = vsub.s32 1, %v712
  %v714 = vrot.slane %v686, %v713
  %v715 = vmul.f32 %v705, %v710
  %v716 = vmul.f32 %v705, %v714
  %v717 = vadd.f32 %v701, %v715
  %v718 = vadd.f32 %v702, %v716
  %719 = vset.pattern.permute.xlu0 26
  %720 = vperm.xlu0 %719, %v23
  %v721 = vpop.permute.xlu0 %720
  %v723 = vlaneseq
  %v724 = vshrl.u32 %v723, 7
  %v725 = vsub.s32 2, %v724
  %v726 = vrot.slane %v685, %v725
  %v727 = vlaneseq
  %v728 = vshrl.u32 %v727, 7
  %v729 = vsub.s32 2, %v728
  %v730 = vrot.slane %v686, %v729
  %v731 = vmul.f32 %v721, %v726
  %v732 = vmul.f32 %v721, %v730
  %v733 = vadd.f32 %v717, %v731
  %v734 = vadd.f32 %v718, %v732
  %735 = vset.pattern.permute.xlu0 27
  %736 = vperm.xlu0 %735, %v23
  %v737 = vpop.permute.xlu0 %736
  %v739 = vlaneseq
  %v740 = vshrl.u32 %v739, 7
  %v741 = vsub.s32 3, %v740
  %v742 = vrot.slane %v685, %v741
  %v743 = vlaneseq
  %v744 = vshrl.u32 %v743, 7
  %v745 = vsub.s32 3, %v744
  %v746 = vrot.slane %v686, %v745
  %v747 = vmul.f32 %v737, %v742
  %v748 = vmul.f32 %v737, %v746
  %v749 = vadd.f32 %v733, %v747
  %v750 = vadd.f32 %v734, %v748
  %751 = vrot.lane.b32.xlu0 %v165, 96
  %v752 = vpop.permute.xlu0 %751
  %753 = vrot.lane.b32.xlu0 %v166, 96
  %v754 = vpop.permute.xlu0 %753
  %vm755 = vcmp.lt.s32.totalorder %v174, 96
  %v756 = vsel %vm755, %v752, %v754
  %v757 = vsel %vm755, %v754, %v752
  %s758 = scalar_lea.vmem %s1, 7
  %v759 = vld [vmem:[%s758] ss:$8 sm:$0x3]
  %v761 = vlaneseq
  %v762 = vshrl.u32 %v761, 7
  %v763 = vsub.s32 0, %v762
  %v764 = vrot.slane %v759, %v763
  %v765 = vlaneseq
  %v766 = vshrl.u32 %v765, 7
  %v767 = vsub.s32 1, %v766
  %v768 = vrot.slane %v759, %v767
  %v771 = vmul.f32 %v756, %v764
  %v772 = vmul.f32 %v757, %v768
  %773 = vset.pattern.permute.xlu0 28
  %774 = vperm.xlu0 %773, %v23
  %v775 = vpop.permute.xlu0 %774
  %v777 = vlaneseq
  %v778 = vshrl.u32 %v777, 7
  %v779 = vsub.s32 0, %v778
  %v780 = vrot.slane %v771, %v779
  %v781 = vlaneseq
  %v782 = vshrl.u32 %v781, 7
  %v783 = vsub.s32 0, %v782
  %v784 = vrot.slane %v772, %v783
  %v785 = vmul.f32 %v775, %v780
  %v786 = vmul.f32 %v775, %v784
  %v787 = vadd.f32 %v749, %v785
  %v788 = vadd.f32 %v750, %v786
  %789 = vset.pattern.permute.xlu0 29
  %790 = vperm.xlu0 %789, %v23
  %v791 = vpop.permute.xlu0 %790
  %v793 = vlaneseq
  %v794 = vshrl.u32 %v793, 7
  %v795 = vsub.s32 1, %v794
  %v796 = vrot.slane %v771, %v795
  %v797 = vlaneseq
  %v798 = vshrl.u32 %v797, 7
  %v799 = vsub.s32 1, %v798
  %v800 = vrot.slane %v772, %v799
  %v801 = vmul.f32 %v791, %v796
  %v802 = vmul.f32 %v791, %v800
  %v803 = vadd.f32 %v787, %v801
  %v804 = vadd.f32 %v788, %v802
  %805 = vset.pattern.permute.xlu0 30
  %806 = vperm.xlu0 %805, %v23
  %v807 = vpop.permute.xlu0 %806
  %v809 = vlaneseq
  %v810 = vshrl.u32 %v809, 7
  %v811 = vsub.s32 2, %v810
  %v812 = vrot.slane %v771, %v811
  %v813 = vlaneseq
  %v814 = vshrl.u32 %v813, 7
  %v815 = vsub.s32 2, %v814
  %v816 = vrot.slane %v772, %v815
  %v817 = vmul.f32 %v807, %v812
  %v818 = vmul.f32 %v807, %v816
  %v819 = vadd.f32 %v803, %v817
  %v820 = vadd.f32 %v804, %v818
  %821 = vset.pattern.permute.xlu0 31
  %822 = vperm.xlu0 %821, %v23
  %v823 = vpop.permute.xlu0 %822
  %v825 = vlaneseq
  %v826 = vshrl.u32 %v825, 7
  %v827 = vsub.s32 3, %v826
  %v828 = vrot.slane %v771, %v827
  %v829 = vlaneseq
  %v830 = vshrl.u32 %v829, 7
  %v831 = vsub.s32 3, %v830
  %v832 = vrot.slane %v772, %v831
  %v833 = vmul.f32 %v823, %v828
  %v834 = vmul.f32 %v823, %v832
  %v835 = vadd.f32 %v819, %v833
  %v836 = vadd.f32 %v820, %v834
  %837 = vrot.lane.b32.xlu0 %v165, 94
  %v838 = vpop.permute.xlu0 %837
  %839 = vrot.lane.b32.xlu0 %v166, 94
  %v840 = vpop.permute.xlu0 %839
  %vm841 = vcmp.lt.s32.totalorder %v174, 94
  %v842 = vsel %vm841, %v838, %v840
  %v843 = vsel %vm841, %v840, %v838
  %s844 = scalar_lea.vmem %s1, 16
  %v845 = vld [vmem:[%s844] ss:$8 sm:$0x3]
  %v847 = vlaneseq
  %v848 = vshrl.u32 %v847, 7
  %v849 = vsub.s32 0, %v848
  %v850 = vrot.slane %v845, %v849
  %v851 = vlaneseq
  %v852 = vshrl.u32 %v851, 7
  %v853 = vsub.s32 1, %v852
  %v854 = vrot.slane %v845, %v853
  %v857 = vmul.f32 %v842, %v850
  %v858 = vmul.f32 %v843, %v854
  %859 = vset.pattern.permute.xlu0 32
  %860 = vperm.xlu0 %859, %v23
  %v861 = vpop.permute.xlu0 %860
  %v863 = vlaneseq
  %v864 = vshrl.u32 %v863, 7
  %v865 = vsub.s32 0, %v864
  %v866 = vrot.slane %v857, %v865
  %v867 = vlaneseq
  %v868 = vshrl.u32 %v867, 7
  %v869 = vsub.s32 0, %v868
  %v870 = vrot.slane %v858, %v869
  %v871 = vmul.f32 %v861, %v866
  %v872 = vmul.f32 %v861, %v870
  %v873 = vadd.f32 %v835, %v871
  %v874 = vadd.f32 %v836, %v872
  %875 = vset.pattern.permute.xlu0 33
  %876 = vperm.xlu0 %875, %v23
  %v877 = vpop.permute.xlu0 %876
  %v879 = vlaneseq
  %v880 = vshrl.u32 %v879, 7
  %v881 = vsub.s32 1, %v880
  %v882 = vrot.slane %v857, %v881
  %v883 = vlaneseq
  %v884 = vshrl.u32 %v883, 7
  %v885 = vsub.s32 1, %v884
  %v886 = vrot.slane %v858, %v885
  %v887 = vmul.f32 %v877, %v882
  %v888 = vmul.f32 %v877, %v886
  %v889 = vadd.f32 %v873, %v887
  %v890 = vadd.f32 %v874, %v888
  %891 = vset.pattern.permute.xlu0 34
  %892 = vperm.xlu0 %891, %v23
  %v893 = vpop.permute.xlu0 %892
  %v895 = vlaneseq
  %v896 = vshrl.u32 %v895, 7
  %v897 = vsub.s32 2, %v896
  %v898 = vrot.slane %v857, %v897
  %v899 = vlaneseq
  %v900 = vshrl.u32 %v899, 7
  %v901 = vsub.s32 2, %v900
  %v902 = vrot.slane %v858, %v901
  %v903 = vmul.f32 %v893, %v898
  %v904 = vmul.f32 %v893, %v902
  %v905 = vadd.f32 %v889, %v903
  %v906 = vadd.f32 %v890, %v904
  %907 = vset.pattern.permute.xlu0 35
  %908 = vperm.xlu0 %907, %v23
  %v909 = vpop.permute.xlu0 %908
  %v911 = vlaneseq
  %v912 = vshrl.u32 %v911, 7
  %v913 = vsub.s32 3, %v912
  %v914 = vrot.slane %v857, %v913
  %v915 = vlaneseq
  %v916 = vshrl.u32 %v915, 7
  %v917 = vsub.s32 3, %v916
  %v918 = vrot.slane %v858, %v917
  %v919 = vmul.f32 %v909, %v914
  %v920 = vmul.f32 %v909, %v918
  %v921 = vadd.f32 %v905, %v919
  %v922 = vadd.f32 %v906, %v920
  %923 = vset.pattern.permute.xlu0 1
  %924 = vperm.xlu0 %923, %v24
  %v925 = vpop.permute.xlu0 %924
  %v927 = vadd.f32 %v921, %v925
  %v928 = vadd.f32 %v922, %v925
  %v929 = vmax.f32 %v927, 0.0
  %v930 = vmax.f32 %v928, 0.0
  %v931 = vadd.f32 %v929, %v161
  %v932 = vadd.f32 %v930, %v162
  %933 = vset.pattern.permute.xlu0 2
  %934 = vperm.xlu0 %933, %v24
  %v935 = vpop.permute.xlu0 %934
  %v937 = vmul.f32 %v935, %v931
  %v938 = vmul.f32 %v935, %v932
  %939 = vset.pattern.permute.xlu0 3
  %940 = vperm.xlu0 %939, %v24
  %v941 = vpop.permute.xlu0 %940
  %v943 = vadd.f32 %v937, %v941
  %v944 = vadd.f32 %v938, %v941
  %v947 = vcombine.low %v943, %v944
  %949 = vst [vmem:[%s5] sm:$0xff] %v947
  // Predicated region
  $region22: #{resnet_conv2d_block.1} parent=0 // pred_check
    _
  $region23: #{resnet_conv2d_block.1} parent=0 // pred_check_branch
    %951 = sbr.rel (0) target = $region25
  $region24: #{resnet_conv2d_block.1} parent=0 // pred_region
    _
  $region25: #{resnet_conv2d_block.1} parent=0 // pred_fallthru
    _
  // Predicated region
  $region26: #{resnet_conv2d_block.1} parent=0 // pred_check
    _
  $region27: #{resnet_conv2d_block.1} parent=0 // pred_check_branch
    %953 = sbr.rel (0) target = $region29
  $region28: #{resnet_conv2d_block.1} parent=0 // pred_region
    _
  $region29: #{resnet_conv2d_block.1} parent=0 // pred_fallthru
    _

</llo_original>
